<compile_context>
chip_gen: v5e
topology: v5e:2x2
jax: 0.10.0
libtpu: 0.0.40
codegen_flags: <defaults>
</compile_context>

<pallas_src>
import jax
import jax.numpy as jnp
from jax.experimental import pallas as pl
from jax.experimental.pallas import tpu as pltpu


def _copy_kernel(x_ref, o_ref):
    # Pure vreg-to-vreg move on a lane-dense (row_tile, Wp*D) tile.
    o_ref[...] = x_ref[...]


def concatenate_module(x, img_size, patch_size):
    """Pallas equivalent of ConcatenateModule.forward.

    x: (B, Np, D) with Np == (h//patch_size) * (w//patch_size)
    returns: (B, h//patch_size, w//patch_size, D)
    """
    h, w, _c = img_size
    hp = h // patch_size
    wp = w // patch_size
    b, np_, d = x.shape
    assert np_ == hp * wp, "token count must match patch grid"

    # NOTE: the fastest version on every TPU generation is simply
    #   return jnp.reshape(x, (b, hp, wp, d))
    # (metadata-only).  The pallas_call below exists as a fusion-anchor-style
    # kernel and is written to run at the HBM roofline.

    # Free metadata reshape to a lane-dense 2-D view.
    rows = b * hp          # one row per (batch, patch-row)
    cols = wp * d          # channels-last, contiguous -> wide lane dimension
    x2d = x.reshape(rows, cols)

    itemsize = jnp.dtype(x.dtype).itemsize

    # Row-tile sizing: target ~4 MiB per tile so 2 double-buffers x (in + out)
    # (~16 MiB worst case) stays within the scoped VMEM limit on every
    # generation (16 MiB v5e, 32 MiB v6e, 32-of-64 MiB v7x) without needing
    # to raise vmem_limit_bytes.
    target_tile_bytes = 4 * 1024 * 1024
    row_tile = max(1, target_tile_bytes // (cols * itemsize))
    # Sublane alignment: multiples of 32 rows are safe for f32/bf16/int8.
    row_tile = (row_tile // 32) * 32
    if row_tile < 32 or row_tile >= rows or rows % 32 != 0:
        # Small or ragged row count: one grid step over the whole tensor
        # (block dim equal to the full array dim is always legal).
        row_tile = rows
    grid = (pl.cdiv(rows, row_tile),)

    out2d = pl.pallas_call(
        _copy_kernel,
        out_shape=jax.ShapeDtypeStruct((rows, cols), x.dtype),
        grid_spec=pltpu.PrefetchScalarGridSpec(
            num_scalar_prefetch=0,
            grid=grid,
            in_specs=[pl.BlockSpec((row_tile, cols), lambda i: (i, 0))],
            out_specs=pl.BlockSpec((row_tile, cols), lambda i: (i, 0)),
        ),
        compiler_params=pltpu.CompilerParams(
            # Independent row-tiles: sharded across both TCs on v7x, neutral
            # on v5e/v6e.
            dimension_semantics=("parallel",),
        ),
        cost_estimate=pl.CostEstimate(
            flops=0,
            transcendentals=0,
            bytes_accessed=2 * rows * cols * itemsize,
        ),
    )(x2d)

    # Free metadata reshape back to the module's output layout.
    return out2d.reshape(b, hp, wp, d)


if __name__ == "__main__":
    # Small, consistent shapes: img_size = (16, 16, 3), patch_size = 2
    #   -> Hp = Wp = 8, Np = 64; embed dim D = 32; batch B = 2.
    img_size = (16, 16, 3)
    patch_size = 2
    B, D = 2, 32
    Hp, Wp = img_size[0] // patch_size, img_size[1] // patch_size
    Np = Hp * Wp

    key = jax.random.PRNGKey(0)
    x = jax.random.normal(key, (B, Np, D), dtype=jnp.float32)

    out = concatenate_module(x, img_size, patch_size)
    out = jax.block_until_ready(out)

    # reference: plain reshape (exact PyTorch forward semantics)
    ref = x.reshape(B, Hp, Wp, D)
    assert out.shape == (B, Hp, Wp, D)
    assert out.dtype == x.dtype
    assert jnp.array_equal(out, ref)

    print("KERNEL_OK")
</pallas_src>

<mosaic_0001>
module attributes {stable_mosaic.version = 11 : i64} {
  func.func @_copy_kernel(%arg0: i32, %arg1: memref<16x256xf32, #tpu.memory_space<vmem>>, %arg2: memref<16x256xf32, #tpu.memory_space<vmem>>) attributes {dimension_semantics = [#tpu.dimension_semantics<parallel>], iteration_bounds = array<i64: 1>, scalar_prefetch = 0 : i64, scratch_operands = 0 : i64, tpu.core_type = #tpu.core_type<tc>, window_params = [{transform_indices = @transform_0, window_bounds = array<i64: 16, 256>}, {transform_indices = @transform_1, window_bounds = array<i64: 16, 256>}]} {
    %c0 = arith.constant 0 : index
    %c0_0 = arith.constant 0 : index
    %0 = vector.load %arg1[%c0, %c0_0] : memref<16x256xf32, #tpu.memory_space<vmem>>, vector<16x256xf32>
    %c0_1 = arith.constant 0 : index
    %c0_2 = arith.constant 0 : index
    %1 = vector.load %arg2[%c0_1, %c0_2] : memref<16x256xf32, #tpu.memory_space<vmem>>, vector<16x256xf32>
    tpu.vector_store %arg2[%c0_1, %c0_2], %0 {strides = array<i32>} : memref<16x256xf32, #tpu.memory_space<vmem>>, vector<16x256xf32>,
    return
  }
  func.func @transform_0(%arg0: i32) -> (i32, i32) {
    %c0_i32 = arith.constant 0 : i32
    %c0_i32_0 = arith.constant 0 : i32
    return %arg0, %c0_i32 : i32, i32
  }
  func.func @transform_1(%arg0: i32) -> (i32, i32) {
    %c0_i32 = arith.constant 0 : i32
    %c0_i32_0 = arith.constant 0 : i32
    return %arg0, %c0_i32 : i32, i32
  }
}

</mosaic_0001>

<llo_original>
// kernel: tpu_custom_call.1
$region0: #{tpu_custom_call.1}
  #allocation0 [shape = 'u32[]', space=smem, size = 0x4, offset = 0x4, fixed_abs, tag = 'smem constant byte address 0x4 - core index']
  #allocation1 [shape = 'u32[72,128]{1,0:T(1,128)}', space=vmem, size = 0x9000, scoped, tag = 'internal scratch']
  %s0 = inlined_call_operand.hbm [shape: f32[16,256], index: 0, kind: input, shape index: {}]
  %s1 = inlined_call_operand.hbm [shape: f32[16,256], index: 1, kind: output, shape index: {}]
  %s2 = sld [smem:[#allocation0]]
  $region18: #{tpu_custom_call.1} parent=0
    _
  %s4 = ssub.s32 1, %s2
  %s5 = scalar_select 0, %s4, %s2
  $region1: #{tpu_custom_call.1} parent=0
    #allocation2 [shape = 'u8[16384]{0}', space=vmem, size = 0x4000, scoped, tag = 'input window, operand 0, single buffered']
    #allocation3 [shape = 's32[1]{0}', space=sflag, size = 0x4, scoped, tag = 'scoped memory for tpu_custom_call.1']
    #allocation4 [shape = 's32[1]{0}', space=sflag, size = 0x4, scoped, tag = 'scoped memory for tpu_custom_call.1']
    #allocation5 [shape = 'u8[16384]{0}', space=vmem, size = 0x4000, scoped, tag = 'output window, operand 0, single buffered']
    %6 = vsyncpa [#allocation3], 0
    %7 = vsyncpa [#allocation4], 0
    // Predicated region
    $region2: #{tpu_custom_call.1} parent=1 // pred_check
      _
    $region3: #{tpu_custom_call.1} parent=1 // pred_check_branch
      %9 = sbr.rel (0) target = $region5
    $region4: #{tpu_custom_call.1} parent=1 // pred_region
      %11 = vsyncadd [#allocation3], 0
      %s12 = sshll.u32 %s0, 4
      %s13 = int_to_ptr.hbm [resolvable:$true] %s12
      %s14 = sshll.u32 [#allocation2], 4
      %s15 = int_to_ptr.vmem [resolvable:$true] %s14
      %20 = dma.hbm_to_vmem [thread:$0]  %s13, 512, %s15, [#allocation3], 256, 256, 16
    $region5: #{tpu_custom_call.1} parent=1 // pred_fallthru
      _
    // Predicated region
    $region6: #{tpu_custom_call.1} parent=1 // pred_check
      _
    $region7: #{tpu_custom_call.1} parent=1 // pred_check_branch
      %22 = sbr.rel (0) target = $region9
    $region8: #{tpu_custom_call.1} parent=1 // pred_region
      %24 = dma.done [#allocation3], 512
    $region9: #{tpu_custom_call.1} parent=1 // pred_fallthru
      _
    %v25 = vld [vmem:[#allocation2] sm:$0xff]
    %v26 = vld [vmem:[#allocation2 + $0x8] sm:$0xff]
    %v27 = vld [vmem:[#allocation2 + $0x10] sm:$0xff]
    %v28 = vld [vmem:[#allocation2 + $0x18] sm:$0xff]
    %29 = vst [vmem:[#allocation5] sm:$0xff] %v25
    %30 = vst [vmem:[#allocation5 + $0x8] sm:$0xff] %v26
    %31 = vst [vmem:[#allocation5 + $0x10] sm:$0xff] %v27
    %32 = vst [vmem:[#allocation5 + $0x18] sm:$0xff] %v28
    // Predicated region
    $region10: #{tpu_custom_call.1} parent=1 // pred_check
      _
    $region11: #{tpu_custom_call.1} parent=1 // pred_check_branch
      %34 = sbr.rel (0) target = $region13
    $region12: #{tpu_custom_call.1} parent=1 // pred_region
      %36 = vsyncadd [#allocation4], 0
      %s37 = sshll.u32 [#allocation5], 4
      %s38 = int_to_ptr.vmem [resolvable:$true] %s37
      %s39 = sshll.u32 %s1, 4
      %s40 = int_to_ptr.hbm [resolvable:$true] %s39
      %45 = dma.vmem_to_hbm [thread:$0]  %s38, 512, %s40, [#allocation4], 256, 256, 16
    $region13: #{tpu_custom_call.1} parent=1 // pred_fallthru
      _
    // Predicated region
    $region14: #{tpu_custom_call.1} parent=1 // pred_check
      _
    $region15: #{tpu_custom_call.1} parent=1 // pred_check_branch
      %47 = sbr.rel (0) target = $region17
    $region16: #{tpu_custom_call.1} parent=1 // pred_region
      %49 = dma.done [#allocation4], 512
    $region17: #{tpu_custom_call.1} parent=1 // pred_fallthru
      _
    %50 = vsyncpa [#allocation3], 1
    %51 = vsyncpa [#allocation4], 1

</llo_original>
